<compile_context>
chip_gen: v6e
topology: v6e:2x2x1
jax: 0.10.0
libtpu: 0.0.40
codegen_flags: <defaults>
</compile_context>

<pallas_src>
import functools

import jax
import jax.numpy as jnp
from jax.experimental import pallas as pl
from jax.experimental.pallas import tpu as pltpu


# ----------------------------------------------------------------------------
# Kernel
# ----------------------------------------------------------------------------
def _pos_add_kernel(x_ref, pos_ref, o_ref, *, nb):
    # x_ref/o_ref: (tc, nb*d_model) contiguous slab (nb batches folded per block)
    # pos_ref:     (tc, d_model) rows of the positional table (reused over batch)
    pos = pos_ref[...].astype(jnp.float32)          # cast in-kernel: free VPU slack
    if nb > 1:
        tc, dm = pos.shape
        if dm % 128 == 0:
            # lane-aligned broadcast over the folded batch columns
            pos = jnp.broadcast_to(pos[:, None, :], (tc, nb, dm)).reshape(tc, nb * dm)
        else:
            pos = jnp.concatenate([pos] * nb, axis=-1)
    o_ref[...] = (x_ref[...].astype(jnp.float32) + pos).astype(o_ref.dtype)


# ----------------------------------------------------------------------------
# Generation-aware tiling heuristics
# ----------------------------------------------------------------------------
def _device_budget():
    """(target_block_bytes, vmem_limit_bytes, min_total_steps) per TPU generation."""
    try:
        cap = pltpu.get_tpu_info().vmem_capacity_bytes
    except Exception:
        cap = 64 << 20                      # conservative (v7x-class) fallback
    if cap >= (96 << 20):                   # v5e / v6e: 128 MiB physical VMEM
        return 4 << 20, 64 << 20, 4
    # v7x-class: 64 MiB physical VMEM, 2 TensorCores -> smaller blocks, deeper grid
    return 2 << 20, 32 << 20, 8


def _choose_batch_fold(B, d_model, itemsize, budget):
    """How many batch columns to fold into each block."""
    if d_model % 128 != 0:
        return B                            # full last dim is the only legal lane width
    if 8 * B * d_model * itemsize <= budget:
        return B                            # whole row fits: fully contiguous DMA
    for cand in range(B, 0, -1):            # largest divisor of B within budget
        if B % cand == 0 and 8 * cand * d_model * itemsize <= budget:
            return cand
    return 1


def _choose_seq_tile(chunk, row_bytes, budget, min_total_steps, batch_steps):
    """Largest legal sequence tile within the byte budget; shrink (never below
    8 rows) until the grid has enough steps to pipeline / shard across TCs."""
    if chunk <= 8:
        return chunk                        # full dim is the only legal tile
    tc = (budget // max(row_bytes, 1)) // 8 * 8
    tc = max(8, min(tc, chunk))             # tc is a multiple of 8, or == chunk
    while tc > 8 and pl.cdiv(chunk, tc) * batch_steps < min_total_steps:
        new_tc = max(8, (tc // 2) // 8 * 8)
        if new_tc == tc:
            break
        tc = new_tc
    return tc


# ----------------------------------------------------------------------------
# Wrapper
# ----------------------------------------------------------------------------
def positional_encoding_forward(x, pos_table, *, donate_input=False):
    """Eval-mode forward of the torch PositionalEncoding module.

    x: (chunk_size, B, d_model); pos_table: (max_len, d_model) (fed unsliced)."""
    chunk, B, d_model = x.shape
    max_len, dm = pos_table.shape
    assert dm == d_model and chunk <= max_len

    itemsize = x.dtype.itemsize
    target_block_bytes, vmem_limit_bytes, min_total_steps = _device_budget()

    nb = _choose_batch_fold(B, d_model, itemsize, target_block_bytes)
    batch_steps = pl.cdiv(B, nb)
    tc = _choose_seq_tile(chunk, nb * d_model * itemsize, target_block_bytes,
                          min_total_steps, batch_steps)
    seq_steps = pl.cdiv(chunk, tc)

    x2 = x.reshape(chunk, B * d_model)      # free contiguous reshape

    out2 = pl.pallas_call(
        functools.partial(_pos_add_kernel, nb=nb),
        out_shape=jax.ShapeDtypeStruct((chunk, B * d_model), x.dtype),
        grid_spec=pltpu.PrefetchScalarGridSpec(
            num_scalar_prefetch=0,
            grid=(seq_steps, batch_steps),
            in_specs=[
                # nb batches' feature columns of sequence tile i: one contiguous slab
                pl.BlockSpec((tc, nb * d_model), lambda i, j: (i, j)),
                # same pos rows for every batch tile -> DMA reused across inner axis
                pl.BlockSpec((tc, d_model), lambda i, j: (i, 0)),
            ],
            out_specs=pl.BlockSpec((tc, nb * d_model), lambda i, j: (i, j)),
        ),
        compiler_params=pltpu.CompilerParams(
            # seq axis is the parallel (TC-shardable) one; inner batch axis stays
            # sequential so the pos-block reuse survives per core.
            dimension_semantics=("parallel", "arbitrary"),
            vmem_limit_bytes=vmem_limit_bytes),
        input_output_aliases=({0: 0} if donate_input else {}),
    )(x2, pos_table)
    return out2.reshape(chunk, B, d_model)


def init_pos_embedding(key, max_len, d_model, padding_idx=0, dtype=jnp.float32):
    # nn.Embedding default init: N(0, 1); padding_idx row is zeroed.
    w = jax.random.normal(key, (max_len, d_model), dtype=dtype)
    w = w.at[padding_idx].set(0.0)
    return w


# ----------------------------------------------------------------------------
# Demo / correctness checks
# ----------------------------------------------------------------------------
if __name__ == "__main__":
    def reference(x, pos_table):
        c = x.shape[0]
        out = x.astype(jnp.float32) + pos_table[:c].astype(jnp.float32)[:, None, :]
        return out.astype(x.dtype)

    key = jax.random.PRNGKey(0)
    k1, k2, k3, k4, k5, k6 = jax.random.split(key, 6)

    # 1) Tiny shape from the module's convention (d_model=32 < 128 -> nb=B full-dim path).
    chunk, B, d, max_len = 8, 2, 32, 16
    x_small = jax.random.normal(k1, (chunk, B, d), dtype=jnp.float32)
    w_small = init_pos_embedding(k2, max_len, d, padding_idx=0)
    out = jax.block_until_ready(positional_encoding_forward(x_small, w_small))
    assert out.shape == (chunk, B, d)
    assert jnp.allclose(out, reference(x_small, w_small), atol=1e-6, rtol=1e-6)

    # 2) Lane-dense path (d_model multiple of 128), f32.
    chunk, B, d, max_len = 64, 2, 128, 128
    x_big = jax.random.normal(k3, (chunk, B, d), dtype=jnp.float32)
    w_big = init_pos_embedding(k4, max_len, d, padding_idx=0)
    out = jax.block_until_ready(positional_encoding_forward(x_big, w_big))
    assert jnp.allclose(out, reference(x_big, w_big), atol=1e-6, rtol=1e-6)

    # 3) Same path in bf16 (add computed in f32 in-kernel, output in x.dtype).
    x_bf = x_big.astype(jnp.bfloat16)
    out_bf = jax.block_until_ready(positional_encoding_forward(x_bf, w_big))
    assert jnp.allclose(out_bf.astype(jnp.float32),
                        reference(x_bf, w_big).astype(jnp.float32),
                        atol=1e-2, rtol=1e-2)

    # 4) Ragged sequence (chunk not a multiple of the tile) -> cdiv grid, masked last block.
    chunk, B, d, max_len = 20, 2, 128, 32
    x_rag = jax.random.normal(k5, (chunk, B, d), dtype=jnp.float32)
    w_rag = init_pos_embedding(k6, max_len, d, padding_idx=0)
    out = jax.block_until_ready(positional_encoding_forward(x_rag, w_rag))
    assert out.shape == (chunk, B, d)
    assert jnp.allclose(out, reference(x_rag, w_rag), atol=1e-6, rtol=1e-6)

    print("KERNEL_OK")
</pallas_src>

<mosaic_0001>
module attributes {stable_mosaic.version = 11 : i64} {
  func.func @_pos_add_kernel(%arg0: i32, %arg1: i32, %arg2: memref<8x64xf32, #tpu.memory_space<vmem>>, %arg3: memref<8x32xf32, #tpu.memory_space<vmem>>, %arg4: memref<8x64xf32, #tpu.memory_space<vmem>>) attributes {dimension_semantics = [#tpu.dimension_semantics<parallel>, #tpu.dimension_semantics<arbitrary>], iteration_bounds = array<i64: 1, 1>, scalar_prefetch = 0 : i64, scratch_operands = 0 : i64, tpu.core_type = #tpu.core_type<tc>, window_params = [{transform_indices = @transform_0, window_bounds = array<i64: 8, 64>}, {transform_indices = @transform_1, window_bounds = array<i64: 8, 32>}, {transform_indices = @transform_2, window_bounds = array<i64: 8, 64>}]} {
    %c0 = arith.constant 0 : index
    %c0_0 = arith.constant 0 : index
    %0 = vector.load %arg3[%c0, %c0_0] : memref<8x32xf32, #tpu.memory_space<vmem>>, vector<8x32xf32>
    %1 = tpu.concatenate %0, %0 in 1 : vector<8x32xf32>, vector<8x32xf32> -> vector<8x64xf32>
    %c0_1 = arith.constant 0 : index
    %c0_2 = arith.constant 0 : index
    %2 = vector.load %arg2[%c0_1, %c0_2] : memref<8x64xf32, #tpu.memory_space<vmem>>, vector<8x64xf32>
    %3 = arith.addf %2, %1 : vector<8x64xf32>
    %c0_3 = arith.constant 0 : index
    %c0_4 = arith.constant 0 : index
    %4 = vector.load %arg4[%c0_3, %c0_4] : memref<8x64xf32, #tpu.memory_space<vmem>>, vector<8x64xf32>
    tpu.vector_store %arg4[%c0_3, %c0_4], %3 {strides = array<i32>} : memref<8x64xf32, #tpu.memory_space<vmem>>, vector<8x64xf32>,
    return
  }
  func.func @transform_0(%arg0: i32, %arg1: i32) -> (i32, i32) {
    %c0_i32 = arith.constant 0 : i32
    return %arg0, %arg1 : i32, i32
  }
  func.func @transform_1(%arg0: i32, %arg1: i32) -> (i32, i32) {
    %c0_i32 = arith.constant 0 : i32
    %c0_i32_0 = arith.constant 0 : i32
    return %arg0, %c0_i32 : i32, i32
  }
  func.func @transform_2(%arg0: i32, %arg1: i32) -> (i32, i32) {
    %c0_i32 = arith.constant 0 : i32
    return %arg0, %arg1 : i32, i32
  }
}

</mosaic_0001>

<llo_original>
// kernel: tpu_custom_call.1
$region0: #{tpu_custom_call.1}
  #allocation0 [shape = 'u32[]', space=smem, size = 0x4, offset = 0x4, fixed_abs, tag = 'smem constant byte address 0x4 - core index']
  #allocation1 [shape = 'u32[144,128]{1,0:T(1,128)}', space=vmem, size = 0x12000, scoped, tag = 'internal scratch']
  %s0 = inlined_call_operand.hbm [shape: f32[8,64], index: 0, kind: input, shape index: {}]
  %s1 = inlined_call_operand.hbm [shape: f32[16,32], index: 1, kind: input, shape index: {}]
  %s2 = inlined_call_operand.hbm [shape: f32[8,64], index: 2, kind: output, shape index: {}]
  %s3 = sld [smem:[#allocation0]]
  $region26: #{tpu_custom_call.1} parent=0
    _
  %s5 = ssub.s32 1, %s3
  %s6 = scalar_select 0, %s5, %s3
  $region1: #{tpu_custom_call.1} parent=0
    #allocation2 [shape = 'u8[4096]{0}', space=vmem, size = 0x1000, scoped, tag = 'input window, operand 0, single buffered']
    #allocation3 [shape = 's32[1]{0}', space=sflag, size = 0x4, scoped, tag = 'scoped memory for tpu_custom_call.1']
    #allocation4 [shape = 's32[1]{0}', space=sflag, size = 0x4, scoped, tag = 'scoped memory for tpu_custom_call.1']
    #allocation5 [shape = 'u8[4096]{0}', space=vmem, size = 0x1000, scoped, tag = 'input window, operand 1, single buffered']
    #allocation6 [shape = 's32[1]{0}', space=sflag, size = 0x4, scoped, tag = 'scoped memory for tpu_custom_call.1']
    #allocation7 [shape = 'u8[4096]{0}', space=vmem, size = 0x1000, scoped, tag = 'output window, operand 0, single buffered']
    %7 = vsyncpa [#allocation3], 0
    %8 = vsyncpa [#allocation6], 0
    %9 = vsyncpa [#allocation4], 0
    // Predicated region
    $region2: #{tpu_custom_call.1} parent=1 // pred_check
      _
    $region3: #{tpu_custom_call.1} parent=1 // pred_check_branch
      %11 = sbr.rel (0) target = $region5
    $region4: #{tpu_custom_call.1} parent=1 // pred_region
      %s13 = ssub.s32 128, 128
      %14 = vsyncadd [#allocation3], %s13
      %s16 = sshll.u32 [#allocation2], 4
      %s17 = int_to_ptr.vmem [resolvable:$true] %s16
      %19 = dma.hbm_to_vmem [thread:$0]  %s0, 128, %s17, [#allocation3]
    $region5: #{tpu_custom_call.1} parent=1 // pred_fallthru
      _
    // Predicated region
    $region6: #{tpu_custom_call.1} parent=1 // pred_check
      _
    $region7: #{tpu_custom_call.1} parent=1 // pred_check_branch
      %21 = sbr.rel (0) target = $region9
    $region8: #{tpu_custom_call.1} parent=1 // pred_region
      %s23 = ssub.s32 128, 128
      %24 = vsyncadd [#allocation6], %s23
      %s26 = sshll.u32 [#allocation5], 4
      %s27 = int_to_ptr.vmem [resolvable:$true] %s26
      %29 = dma.hbm_to_vmem [thread:$0]  %s1, 128, %s27, [#allocation6]
    $region9: #{tpu_custom_call.1} parent=1 // pred_fallthru
      _
    // Predicated region
    $region10: #{tpu_custom_call.1} parent=1 // pred_check
      _
    $region11: #{tpu_custom_call.1} parent=1 // pred_check_branch
      %31 = sbr.rel (0) target = $region13
    $region12: #{tpu_custom_call.1} parent=1 // pred_region
      %32 = dma.done [#allocation3], 128
    $region13: #{tpu_custom_call.1} parent=1 // pred_fallthru
      _
    // Predicated region
    $region14: #{tpu_custom_call.1} parent=1 // pred_check
      _
    $region15: #{tpu_custom_call.1} parent=1 // pred_check_branch
      %34 = sbr.rel (0) target = $region17
    $region16: #{tpu_custom_call.1} parent=1 // pred_region
      %35 = dma.done [#allocation6], 128
    $region17: #{tpu_custom_call.1} parent=1 // pred_fallthru
      _
    %v36 = vld [vmem:[#allocation5] sm:$0xff]
    %38 = vrot.lane.b32.xlu0 %v36, 32
    %v39 = vpop.permute.xlu0 %38
    %vm41 = vcmask 261120
    %v42 = vsel %vm41, %v36, %v39
    %v43 = vld [vmem:[#allocation2] sm:$0xff]
    %v44 = vadd.f32 %v43, %v42
    %vm45 = vcmask 523264
    %46 = vst.msk [vmem:[#allocation7] sm:$0xff] %vm45, %v44
    // Predicated region
    $region18: #{tpu_custom_call.1} parent=1 // pred_check
      _
    $region19: #{tpu_custom_call.1} parent=1 // pred_check_branch
      %48 = sbr.rel (0) target = $region21
    $region20: #{tpu_custom_call.1} parent=1 // pred_region
      %s50 = ssub.s32 128, 128
      %51 = vsyncadd [#allocation4], %s50
      %s53 = sshll.u32 [#allocation7], 4
      %s54 = int_to_ptr.vmem [resolvable:$true] %s53
      %56 = dma.vmem_to_hbm [thread:$0]  %s54, 128, %s2, [#allocation4]
    $region21: #{tpu_custom_call.1} parent=1 // pred_fallthru
      _
    // Predicated region
    $region22: #{tpu_custom_call.1} parent=1 // pred_check
      _
    $region23: #{tpu_custom_call.1} parent=1 // pred_check_branch
      %58 = sbr.rel (0) target = $region25
    $region24: #{tpu_custom_call.1} parent=1 // pred_region
      %59 = dma.done [#allocation4], 128
    $region25: #{tpu_custom_call.1} parent=1 // pred_fallthru
      _
    %60 = vsyncpa [#allocation3], 1
    %61 = vsyncpa [#allocation6], 1
    %62 = vsyncpa [#allocation4], 1

</llo_original>
